<compile_context>
chip_gen: v7x
topology: tpu7x:2x2x1
jax: 0.10.0
libtpu: 0.0.40
codegen_flags: <defaults>
</compile_context>

<pallas_src>
import jax
import jax.numpy as jnp
from jax.experimental import pallas as pl
from jax.experimental.pallas import tpu as pltpu


# ---------------------------------------------------------------------------
# Kernel
# ---------------------------------------------------------------------------
def _film_kernel(gb_ref, feat_ref, out_ref):
    """Pure streaming FMA: out = feat * gamma_plus1 + beta.

    gb_ref   : [TR, 2]   col 0 = 1+gamma, col 1 = beta (broadcast along lanes)
    feat_ref : [TR, THW]
    out_ref  : [TR, THW]
    """
    g = gb_ref[:, 0:1]
    b = gb_ref[:, 1:2]
    out_ref[...] = feat_ref[...] * g + b


# ---------------------------------------------------------------------------
# Tiling helpers
# ---------------------------------------------------------------------------
def _round_up(x, m):
    return ((x + m - 1) // m) * m


def _largest_aligned_divisor(dim, align, cap):
    """Largest t with t % align == 0, dim % t == 0, t <= cap. Needs dim % align == 0."""
    cap = max(align, min(dim, (cap // align) * align))
    t = cap
    while dim % t != 0:
        t -= align
    return t


def _next_smaller_divisor(dim, align, current):
    """Next smaller aligned divisor of dim below `current`, or `current` if none."""
    t = current - align
    while t >= align and dim % t != 0:
        t -= align
    return t if t >= align else current


def _block_budget():
    """(target_block_bytes, vmem_limit_bytes) chosen per TPU generation."""
    vmem_cap = 128 * 1024 * 1024
    try:
        vmem_cap = int(pltpu.get_tpu_info().vmem_capacity_bytes)
    except Exception:
        pass
    kind = ""
    try:
        kind = jax.devices()[0].device_kind.lower()
    except Exception:
        pass
    if vmem_cap <= 64 * 1024 * 1024:
        # v7x-class: 64 MiB VMEM/TC, ~3.2 TB/s HBM -> big blocks beat step overhead.
        return 8 * 1024 * 1024, 48 * 1024 * 1024
    if "v5" in kind:
        # v5e: ~820 GB/s; 2 MiB blocks already ~93% of roofline.
        return 2 * 1024 * 1024, 16 * 1024 * 1024
    # v6e default.
    return 4 * 1024 * 1024, 32 * 1024 * 1024


# ---------------------------------------------------------------------------
# Wrapper
# ---------------------------------------------------------------------------
def film_layer(features, condition, w_gamma, b_gamma, w_beta, b_beta):
    """FiLM forward.

    features : [B, C, H, W]  (NCHW, like PyTorch)
    condition: [B, D]
    w_gamma, w_beta : [C, D]  (PyTorch nn.Linear weight layout: out x in)
    b_gamma, b_beta : [C]
    """
    B, C, H, W = features.shape
    HW = H * W
    R = B * C
    itemsize = jnp.dtype(features.dtype).itemsize
    sub_align = {4: 8, 2: 16, 1: 32}.get(itemsize, 8)

    # --- 1) Fused projection via plain XLA (tiny matmul; +1 folded into bias) --
    w_cat = jnp.concatenate([w_gamma.T, w_beta.T], axis=1).astype(jnp.float32)   # [D, 2C]
    b_cat = jnp.concatenate([b_gamma + 1.0, b_beta]).astype(jnp.float32)          # [2C]
    gb = condition.astype(jnp.float32) @ w_cat + b_cat                            # [B, 2C]
    gamma_plus1 = gb[:, :C].reshape(R, 1)
    beta = gb[:, C:].reshape(R, 1)
    gb2 = jnp.concatenate([gamma_plus1, beta], axis=1).astype(features.dtype)     # [R, 2]

    # --- 2) Lane-dense 2-D presentation, padded to (sub_align, 128) ------------
    feat2d = features.reshape(R, HW)
    R_pad = _round_up(R, sub_align)
    HW_pad = _round_up(HW, 128)
    if (R_pad, HW_pad) != (R, HW):
        feat2d = jnp.pad(feat2d, ((0, R_pad - R), (0, HW_pad - HW)))
        gb2 = jnp.pad(gb2, ((0, R_pad - R), (0, 0)))

    # --- 3) Tile selection ------------------------------------------------------
    target_block_bytes, vmem_limit = _block_budget()

    # Prefer full-HW (contiguous) rows; only split the lane axis when even the
    # minimum row count would blow the block budget.
    row_bytes = HW_pad * itemsize
    if sub_align * row_bytes <= target_block_bytes:
        thw = HW_pad
    else:
        lane_cap = max(128, (target_block_bytes // (sub_align * itemsize)) // 128 * 128)
        thw = _largest_aligned_divisor(HW_pad, 128, lane_cap)

    row_cap = max(sub_align, (target_block_bytes // (thw * itemsize)) // sub_align * sub_align)
    tr = _largest_aligned_divisor(R_pad, sub_align, row_cap)

    # Ensure enough grid steps to pipeline / feed both v7x TCs; shrink rows
    # before lanes, and only when the problem is big enough for it to matter.
    total_bytes = R_pad * HW_pad * itemsize
    if total_bytes > 4 * target_block_bytes:
        min_steps = 8
        while (R_pad // tr) * (HW_pad // thw) < min_steps:
            new_tr = _next_smaller_divisor(R_pad, sub_align, tr)
            if new_tr != tr:
                tr = new_tr
                continue
            new_thw = _next_smaller_divisor(HW_pad, 128, thw)
            if new_thw != thw:
                thw = new_thw
                continue
            break

    # --- 4) Streaming FiLM kernel ----------------------------------------------
    cost = pl.CostEstimate(
        flops=2 * R * HW,
        transcendentals=0,
        bytes_accessed=2 * R * HW * itemsize + 2 * R * itemsize,
    )

    out2d = pl.pallas_call(
        _film_kernel,
        out_shape=jax.ShapeDtypeStruct((R_pad, HW_pad), features.dtype),
        grid_spec=pltpu.PrefetchScalarGridSpec(
            num_scalar_prefetch=0,
            grid=(R_pad // tr, HW_pad // thw),
            in_specs=[
                pl.BlockSpec((tr, 2), lambda r, s: (r, 0)),      # [1+gamma | beta]
                pl.BlockSpec((tr, thw), lambda r, s: (r, s)),    # features
            ],
            out_specs=pl.BlockSpec((tr, thw), lambda r, s: (r, s)),
        ),
        compiler_params=pltpu.CompilerParams(
            dimension_semantics=("parallel", "parallel"),
            vmem_limit_bytes=int(vmem_limit),
        ),
        cost_estimate=cost,
    )(gb2, feat2d)

    return out2d[:R, :HW].reshape(B, C, H, W)


# ---------------------------------------------------------------------------
# Reference + test
# ---------------------------------------------------------------------------
def _reference(features, condition, w_gamma, b_gamma, w_beta, b_beta):
    gamma = condition @ w_gamma.T + b_gamma            # [B, C]
    beta = condition @ w_beta.T + b_beta               # [B, C]
    return features * (1.0 + gamma[:, :, None, None]) + beta[:, :, None, None]


if __name__ == "__main__":
    # Small shapes consistent with the module's forward:
    #   features: [batch, feature_dim, H, W], condition: [batch, condition_dim]
    B, C, H, W = 2, 4, 16, 16
    D = 8  # condition_dim

    key = jax.random.PRNGKey(0)
    k_feat, k_cond, k_wg, k_bg, k_wb, k_bb = jax.random.split(key, 6)

    features = jax.random.normal(k_feat, (B, C, H, W), dtype=jnp.float32)
    condition = jax.random.normal(k_cond, (B, D), dtype=jnp.float32)

    # Deterministic nn.Linear-style init: U(-1/sqrt(in), 1/sqrt(in))
    bound = 1.0 / jnp.sqrt(jnp.float32(D))
    w_gamma = jax.random.uniform(k_wg, (C, D), jnp.float32, -bound, bound)
    b_gamma = jax.random.uniform(k_bg, (C,), jnp.float32, -bound, bound)
    w_beta = jax.random.uniform(k_wb, (C, D), jnp.float32, -bound, bound)
    b_beta = jax.random.uniform(k_bb, (C,), jnp.float32, -bound, bound)

    out = film_layer(features, condition, w_gamma, b_gamma, w_beta, b_beta)
    out = jax.block_until_ready(out)

    ref = _reference(features, condition, w_gamma, b_gamma, w_beta, b_beta)
    assert out.shape == (B, C, H, W)
    assert jnp.allclose(out, ref, atol=1e-5, rtol=1e-5), "mismatch vs reference"

    print("KERNEL_OK")
</pallas_src>

<mosaic_0001>
module attributes {stable_mosaic.version = 11 : i64} {
  func.func @_film_kernel(%arg0: i32, %arg1: i32, %arg2: memref<8x2xf32, #tpu.memory_space<vmem>>, %arg3: memref<8x256xf32, #tpu.memory_space<vmem>>, %arg4: memref<8x256xf32, #tpu.memory_space<vmem>>) attributes {dimension_semantics = [#tpu.dimension_semantics<parallel>, #tpu.dimension_semantics<parallel>], iteration_bounds = array<i64: 1, 1>, scalar_prefetch = 0 : i64, scratch_operands = 0 : i64, tpu.core_type = #tpu.core_type<tc>, window_params = [{transform_indices = @transform_0, window_bounds = array<i64: 8, 2>}, {transform_indices = @transform_1, window_bounds = array<i64: 8, 256>}, {transform_indices = @transform_2, window_bounds = array<i64: 8, 256>}]} {
    %c0 = arith.constant 0 : index
    %c0_0 = arith.constant 0 : index
    %0 = vector.load %arg2[%c0, %c0_0] : memref<8x2xf32, #tpu.memory_space<vmem>>, vector<8x1xf32>
    %c0_1 = arith.constant 0 : index
    %c1 = arith.constant 1 : index
    %1 = vector.load %arg2[%c0_1, %c1] : memref<8x2xf32, #tpu.memory_space<vmem>>, vector<8x1xf32>
    %c0_2 = arith.constant 0 : index
    %c0_3 = arith.constant 0 : index
    %2 = vector.load %arg3[%c0_2, %c0_3] : memref<8x256xf32, #tpu.memory_space<vmem>>, vector<8x256xf32>
    %3 = vector.broadcast %0 : vector<8x1xf32> to vector<8x256xf32>
    %4 = arith.mulf %2, %3 : vector<8x256xf32>
    %5 = vector.broadcast %1 : vector<8x1xf32> to vector<8x256xf32>
    %6 = arith.addf %4, %5 : vector<8x256xf32>
    %c0_4 = arith.constant 0 : index
    %c0_5 = arith.constant 0 : index
    %7 = vector.load %arg4[%c0_4, %c0_5] : memref<8x256xf32, #tpu.memory_space<vmem>>, vector<8x256xf32>
    tpu.vector_store %arg4[%c0_4, %c0_5], %6 {strides = array<i32>} : memref<8x256xf32, #tpu.memory_space<vmem>>, vector<8x256xf32>,
    return
  }
  func.func @transform_0(%arg0: i32, %arg1: i32) -> (i32, i32) {
    %c0_i32 = arith.constant 0 : i32
    %c0_i32_0 = arith.constant 0 : i32
    return %arg0, %c0_i32 : i32, i32
  }
  func.func @transform_1(%arg0: i32, %arg1: i32) -> (i32, i32) {
    %c0_i32 = arith.constant 0 : i32
    return %arg0, %arg1 : i32, i32
  }
  func.func @transform_2(%arg0: i32, %arg1: i32) -> (i32, i32) {
    %c0_i32 = arith.constant 0 : i32
    return %arg0, %arg1 : i32, i32
  }
}

</mosaic_0001>

<llo_original>
// kernel: tpu_custom_call.1
$region0: #{tpu_custom_call.1}
  #allocation0 [shape = 'u32[]', space=smem, size = 0x4, offset = 0x4, fixed_abs, tag = 'smem constant byte address 0x4 - core index']
  #allocation1 [shape = 'u32[144,128]{1,0:T(1,128)}', space=vmem, size = 0x12000, scoped, tag = 'internal scratch']
  %s0 = inlined_call_operand.vmem [shape: f32[8,2], index: 0, kind: input, shape index: {}]
  %s1 = inlined_call_operand.hbm [shape: f32[8,256], index: 1, kind: input, shape index: {}]
  %s2 = inlined_call_operand.hbm [shape: f32[8,256], index: 2, kind: output, shape index: {}]
  %s3 = sld [smem:[#allocation0]]
  $region22: #{tpu_custom_call.1} parent=0
    _
  %s5 = ssub.s32 1, %s3
  %s6 = scalar_select 0, %s5, %s3
  $region1: #{tpu_custom_call.1} parent=0
    #allocation2 [shape = 'u8[8192]{0}', space=vmem, size = 0x2000, scoped, tag = 'input window, operand 1, single buffered']
    #allocation3 [shape = 's32[1]{0}', space=sflag, size = 0x4, scoped, tag = 'scoped memory for tpu_custom_call.1']
    #allocation4 [shape = 's32[1]{0}', space=sflag, size = 0x4, scoped, tag = 'scoped memory for tpu_custom_call.1']
    #allocation5 [shape = 'u8[8192]{0}', space=vmem, size = 0x2000, scoped, tag = 'output window, operand 0, single buffered']
    %7 = vsyncpa [#allocation3], 0
    %8 = vsyncpa [#allocation4], 0
    // Predicated region
    $region2: #{tpu_custom_call.1} parent=1 // pred_check
      _
    $region3: #{tpu_custom_call.1} parent=1 // pred_check_branch
      %10 = sbr.rel (0) target = $region5
    $region4: #{tpu_custom_call.1} parent=1 // pred_region
      _
    $region5: #{tpu_custom_call.1} parent=1 // pred_fallthru
      _
    // Predicated region
    $region6: #{tpu_custom_call.1} parent=1 // pred_check
      _
    $region7: #{tpu_custom_call.1} parent=1 // pred_check_branch
      %12 = sbr.rel (0) target = $region9
    $region8: #{tpu_custom_call.1} parent=1 // pred_region
      %s14 = ssub.s32 256, 256
      %15 = vsyncadd [#allocation3], %s14
      %s17 = sshll.u32 [#allocation2], 4
      %s18 = int_to_ptr.vmem [resolvable:$true] %s17
      %20 = dma.hbm_to_vmem [thread:$0]  %s1, 256, %s18, [#allocation3]
    $region9: #{tpu_custom_call.1} parent=1 // pred_fallthru
      _
    // Predicated region
    $region10: #{tpu_custom_call.1} parent=1 // pred_check
      _
    $region11: #{tpu_custom_call.1} parent=1 // pred_check_branch
      %22 = sbr.rel (0) target = $region13
    $region12: #{tpu_custom_call.1} parent=1 // pred_region
      %23 = dma.done [#allocation3], 256
    $region13: #{tpu_custom_call.1} parent=1 // pred_fallthru
      _
    %v24 = vld [vmem:[%s0] sm:$0xff]
    %v25 = vld [vmem:[#allocation2] sm:$0xff]
    %v26 = vld [vmem:[#allocation2 + $0x8] sm:$0xff]
    %28 = vset.pattern.permute.xlu0 0
    %29 = vperm.xlu0 %28, %v24
    %v30 = vpop.permute.xlu0 %29
    %v32 = vmul.f32 %v25, %v30
    %v33 = vmul.f32 %v26, %v30
    %34 = vset.pattern.permute.xlu0 1
    %35 = vperm.xlu0 %34, %v24
    %v36 = vpop.permute.xlu0 %35
    %v38 = vadd.f32 %v32, %v36
    %v39 = vadd.f32 %v33, %v36
    %40 = vst [vmem:[#allocation5] sm:$0xff] %v38
    %41 = vst [vmem:[#allocation5 + $0x8] sm:$0xff] %v39
    // Predicated region
    $region14: #{tpu_custom_call.1} parent=1 // pred_check
      _
    $region15: #{tpu_custom_call.1} parent=1 // pred_check_branch
      %43 = sbr.rel (0) target = $region17
    $region16: #{tpu_custom_call.1} parent=1 // pred_region
      %s45 = ssub.s32 256, 256
      %46 = vsyncadd [#allocation4], %s45
      %s48 = sshll.u32 [#allocation5], 4
      %s49 = int_to_ptr.vmem [resolvable:$true] %s48
      %51 = dma.vmem_to_hbm [thread:$0]  %s49, 256, %s2, [#allocation4]
    $region17: #{tpu_custom_call.1} parent=1 // pred_fallthru
      _
    // Predicated region
    $region18: #{tpu_custom_call.1} parent=1 // pred_check
      _
    $region19: #{tpu_custom_call.1} parent=1 // pred_check_branch
      %53 = sbr.rel (0) target = $region21
    $region20: #{tpu_custom_call.1} parent=1 // pred_region
      %54 = dma.done [#allocation4], 256
    $region21: #{tpu_custom_call.1} parent=1 // pred_fallthru
      _
    %55 = vsyncpa [#allocation3], 1
    %56 = vsyncpa [#allocation4], 1

</llo_original>
